<compile_context>
chip_gen: v7x
topology: tpu7x:2x2x1
jax: 0.10.0
libtpu: 0.0.40
codegen_flags: <defaults>
</compile_context>

<pallas_src>
import jax
import jax.numpy as jnp
from jax import lax
from jax.experimental import pallas as pl
from jax.experimental.pallas import tpu as pltpu


def _self_attn_kernel(inp_ref, w_ref, out_ref):
    # inp_ref: (BB, T, D) VMEM, native dtype
    # w_ref:   (D, 1)     VMEM, native dtype
    # out_ref: (BB, D)    VMEM
    bb, t, d = inp_ref.shape
    x = inp_ref[...]                                   # keep native dtype (no block-sized f32 temp)

    # logits[b, t] = sum_d x[b, t, d] * w[d]  -- contraction on the MXU (idle
    # otherwise), f32 accumulation.  HIGHEST precision is free here (MXU has
    # tons of slack) and keeps f32 inputs at full f32 accuracy.
    x2d = x.reshape(bb * t, d)
    logits = jnp.dot(
        x2d, w_ref[...],
        preferred_element_type=jnp.float32,
        precision=lax.Precision.HIGHEST,
    ).reshape(bb, t)                                   # small (D-times smaller than the block)

    # Numerically stable softmax over the sequence axis, in f32, on the tiny
    # (BB, T) logits tensor.  (The Linear bias would be a constant shift along
    # this axis and cancels exactly -> omitted.)
    m = jnp.max(logits, axis=-1, keepdims=True)        # (BB, 1)
    e = jnp.exp(logits - m)                            # (BB, T) f32
    denom = jnp.sum(e, axis=-1, keepdims=True)         # (BB, 1)

    # cont[b, d] = sum_t e[b, t] * x[b, t, d]  -- batched (1,T)@(T,D) on the MXU
    # (same pattern as flash attention's 'bqk,bkd->bqd'), f32 accumulation.
    e_b = e.astype(x.dtype).reshape(bb, 1, t)          # (BB, 1, T)
    acc = jnp.einsum(
        "bqt,btd->bqd", e_b, x,
        preferred_element_type=jnp.float32,
        precision=lax.Precision.HIGHEST,
    ).reshape(bb, d)                                   # (BB, D) f32

    # Exact normalization (kernel is HBM-bound; the divide is free).
    out_ref[...] = (acc / denom).astype(out_ref.dtype)


def _choose_block_b(B, T, D, itemsize, block_b, vmem_budget_bytes):
    """Pick the per-step batch block size.

    Returns either the full batch B (single block; block == full dim is always
    layout-legal) or a multiple of 8 (sublane-aligned output blocks).
    """
    if block_b is not None:
        bb = max(int(block_b), 1)
    else:
        row_bytes = max(T * D * itemsize, 1)
        bb = max(int(vmem_budget_bytes) // row_bytes, 1)
        if B > 8:
            # Keep at least two grid blocks so the "parallel" batch axis can be
            # sharded across both TensorCores on v7x.
            half = ((((B + 1) // 2) + 7) // 8) * 8
            bb = min(bb, half)
    if bb >= B:
        return B
    bb = max((bb // 8) * 8, 8)
    return min(bb, B)


def self_attn(inp, w, b=None, *, block_b=None, vmem_budget_bytes=8 * 1024 * 1024):
    """SelfAttn forward.

    inp: (B, T, D).  w: scorer weight as (D, 1) (i.e. nn.Linear(D,1).weight.T)
    or any shape with D elements.  b: scorer bias -- accepted for interface
    fidelity but unused: softmax is shift-invariant, so the scalar bias cancels
    exactly.  Returns (B, D).
    """
    B, T, D = inp.shape
    _ = b  # exactly redundant under softmax(dim=1)
    w_col = jnp.reshape(w, (D, 1)).astype(inp.dtype)

    itemsize = jnp.dtype(inp.dtype).itemsize
    bb = _choose_block_b(B, T, D, itemsize, block_b, vmem_budget_bytes)
    num_blocks = pl.cdiv(B, bb)
    b_pad = num_blocks * bb

    # Working set ~= 2x double-buffered input block + small f32 temporaries.
    # Set the scoped-VMEM limit explicitly so v5e's 16 MiB / v7x's 32 MiB
    # defaults are never the constraint (cap at 48 MiB: safe on v7x's 64 MiB).
    block_bytes = bb * T * D * itemsize
    vmem_limit = int(min(48 * 1024 * 1024,
                         max(32 * 1024 * 1024, (5 * block_bytes) // 2 + (2 << 20))))

    # Note: the input is NOT padded (no extra HBM pass).  When bb does not
    # divide B, the last input block is a ragged read (unspecified rows); those
    # rows only influence output rows >= B.  The output is allocated at b_pad
    # rows so every store is in-bounds, and the padding rows are sliced away.
    out = pl.pallas_call(
        _self_attn_kernel,
        out_shape=jax.ShapeDtypeStruct((b_pad, D), inp.dtype),
        grid_spec=pltpu.PrefetchScalarGridSpec(
            num_scalar_prefetch=0,
            grid=(num_blocks,),
            in_specs=[
                pl.BlockSpec((bb, T, D), lambda bi: (bi, 0, 0)),
                pl.BlockSpec((D, 1), lambda bi: (0, 0)),
            ],
            out_specs=pl.BlockSpec((bb, D), lambda bi: (bi, 0)),
        ),
        compiler_params=pltpu.CompilerParams(
            dimension_semantics=("parallel",),
            vmem_limit_bytes=vmem_limit,
        ),
    )(inp, w_col)
    return out if b_pad == B else out[:B]


if __name__ == "__main__":
    import numpy as np

    def _reference(inp, w, b):
        # float64 numpy reference mirroring the PyTorch forward (bias included).
        x = np.asarray(inp, dtype=np.float64)
        wv = np.asarray(w, dtype=np.float64).reshape(-1)
        logits = x @ wv + float(np.asarray(b).reshape(-1)[0])       # (B, T)
        logits = logits - logits.max(axis=1, keepdims=True)
        e = np.exp(logits)
        scores = e / e.sum(axis=1, keepdims=True)                    # (B, T)
        return np.einsum("bt,btd->bd", scores, x)                    # (B, D)

    B, T, D = 2, 8, 32  # batch, seq, dhid

    key = jax.random.PRNGKey(0)
    k_inp, k_w, k_b, k_inp2 = jax.random.split(key, 4)

    inp = jax.random.normal(k_inp, (B, T, D), dtype=jnp.float32)
    # nn.Linear(dhid, 1): weight (1, dhid), bias (1,) -> stored here as (D,1)/(1,1)
    w = jax.random.normal(k_w, (D, 1), dtype=jnp.float32) * 0.1
    b = jax.random.normal(k_b, (1, 1), dtype=jnp.float32) * 0.1

    out = jax.block_until_ready(self_attn(inp, w, b))
    assert out.shape == (B, D)
    np.testing.assert_allclose(np.asarray(out), _reference(inp, w, b),
                               atol=1e-4, rtol=1e-4)

    # Multi-block grid with a ragged batch tail (20 rows, blocks of 8 -> 3 blocks,
    # block-padded output sliced back to 20).  Exercises the no-input-pad path.
    B2 = 20
    inp2 = jax.random.normal(k_inp2, (B2, T, D), dtype=jnp.float32)
    out2 = jax.block_until_ready(self_attn(inp2, w, b, block_b=8))
    assert out2.shape == (B2, D)
    np.testing.assert_allclose(np.asarray(out2), _reference(inp2, w, b),
                               atol=1e-4, rtol=1e-4)

    print("KERNEL_OK")
</pallas_src>

<mosaic_0001>
module attributes {stable_mosaic.version = 11 : i64} {
  func.func @_self_attn_kernel(%arg0: i32, %arg1: memref<2x8x32xf32, #tpu.memory_space<vmem>>, %arg2: memref<32x1xf32, #tpu.memory_space<vmem>>, %arg3: memref<2x32xf32, #tpu.memory_space<vmem>>) attributes {dimension_semantics = [#tpu.dimension_semantics<parallel>], iteration_bounds = array<i64: 1>, scalar_prefetch = 0 : i64, scratch_operands = 0 : i64, tpu.core_type = #tpu.core_type<tc>, window_params = [{transform_indices = @transform_0, window_bounds = array<i64: 2, 8, 32>}, {pipeline_mode = #tpu.pipeline_mode<synchronous>, transform_indices = @transform_1, window_bounds = array<i64: 32, 1>}, {transform_indices = @transform_2, window_bounds = array<i64: 2, 32>}]} {
    %c0 = arith.constant 0 : index
    %c0_0 = arith.constant 0 : index
    %c0_1 = arith.constant 0 : index
    %0 = vector.load %arg1[%c0, %c0_0, %c0_1] : memref<2x8x32xf32, #tpu.memory_space<vmem>>, vector<2x8x32xf32>
    %1 = vector.shape_cast %0 : vector<2x8x32xf32> to vector<16x32xf32>
    %c0_2 = arith.constant 0 : index
    %c0_3 = arith.constant 0 : index
    %2 = vector.load %arg2[%c0_2, %c0_3] : memref<32x1xf32, #tpu.memory_space<vmem>>, vector<32x1xf32>
    %cst = arith.constant dense<0.000000e+00> : vector<16x1xf32>
    %3 = tpu.matmul %1, %2, %cst {dimension_numbers = #tpu.dot_dimension_numbers<[1], [0], [0], [1], [0, 0, 1, 1], [], []>, precision = #tpu.contract_precision<fp32>} : vector<16x32xf32>, vector<32x1xf32>, vector<16x1xf32> -> vector<16x1xf32>
    %4 = vector.shape_cast %3 : vector<16x1xf32> to vector<2x8xf32>
    %cst_4 = arith.constant dense<0xFF800000> : vector<2xf32>
    %5 = vector.multi_reduction <maximumf>, %4, %cst_4 [1] : vector<2x8xf32> to vector<2xf32>
    %6 = vector.shape_cast %5 : vector<2xf32> to vector<2x1xf32>
    %7 = vector.broadcast %6 : vector<2x1xf32> to vector<2x8xf32>
    %8 = arith.subf %4, %7 : vector<2x8xf32>
    %9 = math.exp %8 : vector<2x8xf32>
    %cst_5 = arith.constant dense<0.000000e+00> : vector<2xf32>
    %10 = vector.multi_reduction <add>, %9, %cst_5 [1] : vector<2x8xf32> to vector<2xf32>
    %11 = vector.shape_cast %10 : vector<2xf32> to vector<2x1xf32>
    %12 = vector.shape_cast %9 : vector<2x8xf32> to vector<2x1x8xf32>
    "tpu.trace_start"() <{level = 10 : i32, message = "bqt,btd->bqd"}> : () -> ()
    %cst_6 = arith.constant dense<0.000000e+00> : vector<2x1x32xf32>
    %13 = tpu.matmul %12, %0, %cst_6 {dimension_numbers = #tpu.dot_dimension_numbers<[2], [1], [1], [2], [0, 0, 0, 1, 1, 2], [0], [0]>, precision = #tpu.contract_precision<fp32>} : vector<2x1x8xf32>, vector<2x8x32xf32>, vector<2x1x32xf32> -> vector<2x1x32xf32>
    "tpu.trace_stop"() : () -> ()
    %14 = vector.shape_cast %13 : vector<2x1x32xf32> to vector<2x32xf32>
    %15 = vector.broadcast %11 : vector<2x1xf32> to vector<2x32xf32>
    %16 = arith.divf %14, %15 : vector<2x32xf32>
    %c0_7 = arith.constant 0 : index
    %c0_8 = arith.constant 0 : index
    %17 = vector.load %arg3[%c0_7, %c0_8] : memref<2x32xf32, #tpu.memory_space<vmem>>, vector<2x32xf32>
    tpu.vector_store %arg3[%c0_7, %c0_8], %16 {strides = array<i32>} : memref<2x32xf32, #tpu.memory_space<vmem>>, vector<2x32xf32>,
    return
  }
  func.func @transform_0(%arg0: i32) -> (i32, i32, i32) {
    %c0_i32 = arith.constant 0 : i32
    %c0_i32_0 = arith.constant 0 : i32
    %c0_i32_1 = arith.constant 0 : i32
    return %arg0, %c0_i32, %c0_i32_0 : i32, i32, i32
  }
  func.func @transform_1(%arg0: i32) -> (i32, i32) {
    %c0_i32 = arith.constant 0 : i32
    %c0_i32_0 = arith.constant 0 : i32
    %c0_i32_1 = arith.constant 0 : i32
    return %c0_i32, %c0_i32_0 : i32, i32
  }
  func.func @transform_2(%arg0: i32) -> (i32, i32) {
    %c0_i32 = arith.constant 0 : i32
    %c0_i32_0 = arith.constant 0 : i32
    return %arg0, %c0_i32 : i32, i32
  }
}

</mosaic_0001>

<llo_original>
// kernel: tpu_custom_call.1
$region0: #{tpu_custom_call.1}
  #allocation0 [shape = 'u32[]', space=smem, size = 0x4, offset = 0x4, fixed_abs, tag = 'smem constant byte address 0x4 - core index']
  #allocation1 [shape = 'u32[144,128]{1,0:T(1,128)}', space=vmem, size = 0x12000, scoped, tag = 'internal scratch']
  %s0 = inlined_call_operand.vmem [shape: f32[2,8,32], index: 0, kind: input, shape index: {}]
  %s1 = inlined_call_operand.vmem [shape: f32[32,1], index: 1, kind: input, shape index: {}]
  %s2 = inlined_call_operand.hbm [shape: f32[2,32], index: 2, kind: output, shape index: {}]
  %s3 = sld [smem:[#allocation0]]
  $region18: #{tpu_custom_call.1} parent=0
    _
  %s5 = ssub.s32 1, %s3
  %s6 = scalar_select 0, %s5, %s3
  $region1: #{tpu_custom_call.1} parent=0
    #allocation2 [shape = 'u8[1024]{0}', space=vmem, size = 0x400, scoped, tag = 'output window, operand 0, single buffered']
    #allocation3 [shape = 's32[1]{0}', space=sflag, size = 0x4, scoped, tag = 'scoped memory for tpu_custom_call.1']
    %7 = vsyncpa [#allocation3], 0
    // Predicated region
    $region2: #{tpu_custom_call.1} parent=1 // pred_check
      _
    $region3: #{tpu_custom_call.1} parent=1 // pred_check_branch
      %9 = sbr.rel (0) target = $region5
    $region4: #{tpu_custom_call.1} parent=1 // pred_region
      _
    $region5: #{tpu_custom_call.1} parent=1 // pred_fallthru
      _
    // Predicated region
    $region6: #{tpu_custom_call.1} parent=1 // pred_check
      _
    $region7: #{tpu_custom_call.1} parent=1 // pred_check_branch
      %11 = sbr.rel (0) target = $region9
    $region8: #{tpu_custom_call.1} parent=1 // pred_region
      _
    $region9: #{tpu_custom_call.1} parent=1 // pred_fallthru
      _
    %v12 = vld [vmem:[%s0] sm:$0xff]
    %v13 = vld [vmem:[%s0 + $0x8] sm:$0xff]
    %v14 = vld [vmem:[%s1] sm:$0xff]
    %v15 = vld [vmem:[%s1 + $0x8] sm:$0xff]
    %v16 = vld [vmem:[%s1 + $0x10] sm:$0xff]
    %v17 = vld [vmem:[%s1 + $0x18] sm:$0xff]
    %vm18 = vcmask 261120
    %v20 = vsel %vm18, %v12, 0
    %v23 = vsel %vm18, %v13, 0
    %25 = vmatprep.subr.mxu0 0.0
    %v26 = vand.u32 %v14, 4294901760
    %27 = vmatpush1.msra.mxu0 %v26
    %28 = vmatprep.subr.mxu0 0.0
    %v29 = vand.u32 %v15, 4294901760
    %30 = vmatpush1.msra.mxu0 %v29
    %31 = vmatprep.subr.mxu0 0.0
    %v32 = vand.u32 %v16, 4294901760
    %33 = vmatpush1.msra.mxu0 %v32
    %34 = vmatprep.subr.mxu0 0.0
    %v35 = vand.u32 %v17, 4294901760
    %36 = vmatpush1.msra.mxu0 %v35
    %37 = vmatprep.subr.mxu0 0.0
    %38 = vmatpush1.msra.mxu0 0.0
    %39 = vmatprep.subr.mxu0 0.0
    %40 = vmatpush1.msra.mxu0 0.0
    %41 = vmatprep.subr.mxu0 0.0
    %42 = vmatpush1.msra.mxu0 0.0
    %43 = vmatprep.subr.mxu0 0.0
    %44 = vmatpush1.msra.mxu0 0.0
    %45 = vmatprep.subr.mxu0 0.0
    %46 = vmatpush1.msra.mxu0 0.0
    %47 = vmatprep.subr.mxu0 0.0
    %48 = vmatpush1.msra.mxu0 0.0
    %49 = vmatprep.subr.mxu0 0.0
    %50 = vmatpush1.msra.mxu0 0.0
    %51 = vmatprep.subr.mxu0 0.0
    %52 = vmatpush1.msra.mxu0 0.0
    %53 = vmatprep.subr.mxu0 0.0
    %54 = vmatpush1.msra.mxu0 0.0
    %55 = vmatprep.subr.mxu0 0.0
    %56 = vmatpush1.msra.mxu0 0.0
    %57 = vmatprep.subr.mxu0 0.0
    %58 = vmatpush1.msra.mxu0 0.0
    %59 = vmatprep.subr.mxu0 0.0
    %60 = vmatpush1.msra.mxu0 0.0
    %61 = vmatprep.subr.mxu0 0.0
    %62 = vmatpush1.msra.mxu0 0.0
    %63 = vmatprep.subr.mxu0 0.0
    %64 = vmatpush1.msra.mxu0 0.0
    %65 = vmatprep.subr.mxu0 0.0
    %66 = vmatpush1.msra.mxu0 0.0
    %67 = vmatprep.subr.mxu0 0.0
    %68 = vmatpush1.msra.mxu0 0.0
    %69 = vmatprep.subr.mxu0 0.0
    %70 = vmatpush1.msra.mxu0 0.0
    %71 = vmatprep.subr.mxu0 0.0
    %72 = vmatpush1.msra.mxu0 0.0
    %73 = vmatprep.subr.mxu0 0.0
    %74 = vmatpush1.msra.mxu0 0.0
    %75 = vmatprep.subr.mxu0 0.0
    %76 = vmatpush1.msra.mxu0 0.0
    %77 = vmatprep.subr.mxu0 0.0
    %78 = vmatpush1.msra.mxu0 0.0
    %79 = vmatprep.subr.mxu0 0.0
    %80 = vmatpush1.msra.mxu0 0.0
    %81 = vmatprep.subr.mxu0 0.0
    %82 = vmatpush1.msra.mxu0 0.0
    %83 = vmatprep.subr.mxu0 0.0
    %84 = vmatpush1.msra.mxu0 0.0
    %85 = vmatprep.subr.mxu0 0.0
    %86 = vmatpush1.msra.mxu0 0.0
    %87 = vmatprep.subr.mxu0 0.0
    %88 = vmatpush1.msra.mxu0 0.0
    %89 = vmatprep.subr.mxu0 0.0
    %90 = vmatpush1.msra.mxu0 0.0
    %91 = vmatprep.subr.mxu0 0.0
    %92 = vmatpush1.msra.mxu0 0.0
    %93 = vmatprep.mubr.f32.mxu0 0.0
    %v94 = vand.u32 %v20, 4294901760
    %v95 = vsub.f32 %v20, %v94
    %v96 = vand.u32 %v95, 4294901760
    %v97 = vsub.f32 %v95, %v96
    %v98 = vand.u32 %v97, 4294901760
    %99 = vmatmul.mubr.f32.gmra.mrb[0].mxu0 %v98
    %v100 = vpop.f32.mrb[0].mxu0
    %v101 = vadd.f32 0.0, %v100
    %v102 = vpop.f32.mrb[0].mxu0
    %103 = vmatprep.mubr.f32.mxu0 0.0
    %v104 = vand.u32 %v23, 4294901760
    %v105 = vsub.f32 %v23, %v104
    %v106 = vand.u32 %v105, 4294901760
    %v107 = vsub.f32 %v105, %v106
    %v108 = vand.u32 %v107, 4294901760
    %109 = vmatmul.mubr.f32.gmra.mrb[0].mxu0 %v108
    %v110 = vpop.f32.mrb[0].mxu0
    %v111 = vadd.f32 0.0, %v110
    %v112 = vpop.f32.mrb[0].mxu0
    %113 = vdwg.mxu0
    %114 = vmatprep.subr.mxu0 0.0
    %v115 = vand.u32 %v14, 4294901760
    %v116 = vsub.f32 %v14, %v115
    %v117 = vand.u32 %v116, 4294901760
    %v118 = vsub.f32 %v116, %v117
    %v119 = vand.u32 %v118, 4294901760
    %120 = vmatpush1.msra.mxu0 %v119
    %121 = vmatprep.subr.mxu0 0.0
    %v122 = vand.u32 %v15, 4294901760
    %v123 = vsub.f32 %v15, %v122
    %v124 = vand.u32 %v123, 4294901760
    %v125 = vsub.f32 %v123, %v124
    %v126 = vand.u32 %v125, 4294901760
    %127 = vmatpush1.msra.mxu0 %v126
    %128 = vmatprep.subr.mxu0 0.0
    %v129 = vand.u32 %v16, 4294901760
    %v130 = vsub.f32 %v16, %v129
    %v131 = vand.u32 %v130, 4294901760
    %v132 = vsub.f32 %v130, %v131
    %v133 = vand.u32 %v132, 4294901760
    %134 = vmatpush1.msra.mxu0 %v133
    %135 = vmatprep.subr.mxu0 0.0
    %v136 = vand.u32 %v17, 4294901760
    %v137 = vsub.f32 %v17, %v136
    %v138 = vand.u32 %v137, 4294901760
    %v139 = vsub.f32 %v137, %v138
    %v140 = vand.u32 %v139, 4294901760
    %141 = vmatpush1.msra.mxu0 %v140
    %142 = vmatprep.subr.mxu0 0.0
    %143 = vmatpush1.msra.mxu0 0.0
    %144 = vmatprep.subr.mxu0 0.0
    %145 = vmatpush1.msra.mxu0 0.0
    %146 = vmatprep.subr.mxu0 0.0
    %147 = vmatpush1.msra.mxu0 0.0
    %148 = vmatprep.subr.mxu0 0.0
    %149 = vmatpush1.msra.mxu0 0.0
    %150 = vmatprep.subr.mxu0 0.0
    %151 = vmatpush1.msra.mxu0 0.0
    %152 = vmatprep.subr.mxu0 0.0
    %153 = vmatpush1.msra.mxu0 0.0
    %154 = vmatprep.subr.mxu0 0.0
    %155 = vmatpush1.msra.mxu0 0.0
    %156 = vmatprep.subr.mxu0 0.0
    %157 = vmatpush1.msra.mxu0 0.0
    %158 = vmatprep.subr.mxu0 0.0
    %159 = vmatpush1.msra.mxu0 0.0
    %160 = vmatprep.subr.mxu0 0.0
    %161 = vmatpush1.msra.mxu0 0.0
    %162 = vmatprep.subr.mxu0 0.0
    %163 = vmatpush1.msra.mxu0 0.0
    %164 = vmatprep.subr.mxu0 0.0
    %165 = vmatpush1.msra.mxu0 0.0
    %166 = vmatprep.subr.mxu0 0.0
    %167 = vmatpush1.msra.mxu0 0.0
    %168 = vmatprep.subr.mxu0 0.0
    %169 = vmatpush1.msra.mxu0 0.0
    %170 = vmatprep.subr.mxu0 0.0
    %171 = vmatpush1.msra.mxu0 0.0
    %172 = vmatprep.subr.mxu0 0.0
    %173 = vmatpush1.msra.mxu0 0.0
    %174 = vmatprep.subr.mxu0 0.0
    %175 = vmatpush1.msra.mxu0 0.0
    %176 = vmatprep.subr.mxu0 0.0
    %177 = vmatpush1.msra.mxu0 0.0
    %178 = vmatprep.subr.mxu0 0.0
    %179 = vmatpush1.msra.mxu0 0.0
    %180 = vmatprep.subr.mxu0 0.0
    %181 = vmatpush1.msra.mxu0 0.0
    %182 = vmatprep.subr.mxu0 0.0
    %183 = vmatpush1.msra.mxu0 0.0
    %184 = vmatprep.subr.mxu0 0.0
    %185 = vmatpush1.msra.mxu0 0.0
    %186 = vmatprep.subr.mxu0 0.0
    %187 = vmatpush1.msra.mxu0 0.0
    %188 = vmatprep.subr.mxu0 0.0
    %189 = vmatpush1.msra.mxu0 0.0
    %190 = vmatprep.subr.mxu0 0.0
    %191 = vmatpush1.msra.mxu0 0.0
    %192 = vmatprep.subr.mxu0 0.0
    %193 = vmatpush1.msra.mxu0 0.0
    %194 = vmatprep.subr.mxu0 0.0
    %195 = vmatpush1.msra.mxu0 0.0
    %196 = vmatprep.subr.mxu0 0.0
    %197 = vmatpush1.msra.mxu0 0.0
    %198 = vmatprep.mubr.f32.mxu0 0.0
    %v199 = vand.u32 %v20, 4294901760
    %200 = vmatmul.mubr.f32.gmra.mrb[0].mxu0 %v199
    %v201 = vpop.f32.mrb[0].mxu0
    %v202 = vadd.f32 %v101, %v201
    %v203 = vpop.f32.mrb[0].mxu0
    %204 = vmatprep.mubr.f32.mxu0 0.0
    %v205 = vand.u32 %v23, 4294901760
    %206 = vmatmul.mubr.f32.gmra.mrb[0].mxu0 %v205
    %v207 = vpop.f32.mrb[0].mxu0
    %v208 = vadd.f32 %v111, %v207
    %v209 = vpop.f32.mrb[0].mxu0
    %210 = vdwg.mxu0
    %211 = vmatprep.subr.mxu0 0.0
    %v212 = vand.u32 %v14, 4294901760
    %v213 = vsub.f32 %v14, %v212
    %214 = vmatpush1.msra.mxu0 %v213
    %215 = vmatprep.subr.mxu0 0.0
    %v216 = vand.u32 %v15, 4294901760
    %v217 = vsub.f32 %v15, %v216
    %218 = vmatpush1.msra.mxu0 %v217
    %219 = vmatprep.subr.mxu0 0.0
    %v220 = vand.u32 %v16, 4294901760
    %v221 = vsub.f32 %v16, %v220
    %222 = vmatpush1.msra.mxu0 %v221
    %223 = vmatprep.subr.mxu0 0.0
    %v224 = vand.u32 %v17, 4294901760
    %v225 = vsub.f32 %v17, %v224
    %226 = vmatpush1.msra.mxu0 %v225
    %227 = vmatprep.subr.mxu0 0.0
    %228 = vmatpush1.msra.mxu0 0.0
    %229 = vmatprep.subr.mxu0 0.0
    %230 = vmatpush1.msra.mxu0 0.0
    %231 = vmatprep.subr.mxu0 0.0
    %232 = vmatpush1.msra.mxu0 0.0
    %233 = vmatprep.subr.mxu0 0.0
    %234 = vmatpush1.msra.mxu0 0.0
    %235 = vmatprep.subr.mxu0 0.0
    %236 = vmatpush1.msra.mxu0 0.0
    %237 = vmatprep.subr.mxu0 0.0
    %238 = vmatpush1.msra.mxu0 0.0
    %239 = vmatprep.subr.mxu0 0.0
    %240 = vmatpush1.msra.mxu0 0.0
    %241 = vmatprep.subr.mxu0 0.0
    %242 = vmatpush1.msra.mxu0 0.0
    %243 = vmatprep.subr.mxu0 0.0
    %244 = vmatpush1.msra.mxu0 0.0
    %245 = vmatprep.subr.mxu0 0.0
    %246 = vmatpush1.msra.mxu0 0.0
    %247 = vmatprep.subr.mxu0 0.0
    %248 = vmatpush1.msra.mxu0 0.0
    %249 = vmatprep.subr.mxu0 0.0
    %250 = vmatpush1.msra.mxu0 0.0
    %251 = vmatprep.subr.mxu0 0.0
    %252 = vmatpush1.msra.mxu0 0.0
    %253 = vmatprep.subr.mxu0 0.0
    %254 = vmatpush1.msra.mxu0 0.0
    %255 = vmatprep.subr.mxu0 0.0
    %256 = vmatpush1.msra.mxu0 0.0
    %257 = vmatprep.subr.mxu0 0.0
    %258 = vmatpush1.msra.mxu0 0.0
    %259 = vmatprep.subr.mxu0 0.0
    %260 = vmatpush1.msra.mxu0 0.0
    %261 = vmatprep.subr.mxu0 0.0
    %262 = vmatpush1.msra.mxu0 0.0
    %263 = vmatprep.subr.mxu0 0.0
    %264 = vmatpush1.msra.mxu0 0.0
    %265 = vmatprep.subr.mxu0 0.0
    %266 = vmatpush1.msra.mxu0 0.0
    %267 = vmatprep.subr.mxu0 0.0
    %268 = vmatpush1.msra.mxu0 0.0
    %269 = vmatprep.subr.mxu0 0.0
    %270 = vmatpush1.msra.mxu0 0.0
    %271 = vmatprep.subr.mxu0 0.0
    %272 = vmatpush1.msra.mxu0 0.0
    %273 = vmatprep.subr.mxu0 0.0
    %274 = vmatpush1.msra.mxu0 0.0
    %275 = vmatprep.subr.mxu0 0.0
    %276 = vmatpush1.msra.mxu0 0.0
    %277 = vmatprep.subr.mxu0 0.0
    %278 = vmatpush1.msra.mxu0 0.0
    %279 = vmatprep.subr.mxu0 0.0
    %280 = vmatpush1.msra.mxu0 0.0
    %281 = vmatprep.subr.mxu0 0.0
    %282 = vmatpush1.msra.mxu0 0.0
    %283 = vmatprep.mubr.f32.mxu0 0.0
    %v284 = vand.u32 %v20, 4294901760
    %v285 = vsub.f32 %v20, %v284
    %286 = vmatmul.mubr.f32.gmra.mrb[0].mxu0 %v285
    %v287 = vpop.f32.mrb[0].mxu0
    %v288 = vadd.f32 %v202, %v287
    %v289 = vpop.f32.mrb[0].mxu0
    %290 = vmatprep.mubr.f32.mxu0 0.0
    %v291 = vand.u32 %v23, 4294901760
    %v292 = vsub.f32 %v23, %v291
    %293 = vmatmul.mubr.f32.gmra.mrb[0].mxu0 %v292
    %v294 = vpop.f32.mrb[0].mxu0
    %v295 = vadd.f32 %v208, %v294
    %v296 = vpop.f32.mrb[0].mxu0
    %297 = vdwg.mxu0
    %298 = vmatprep.subr.mxu0 0.0
    %v299 = vand.u32 %v14, 4294901760
    %300 = vmatpush1.msra.mxu0 %v299
    %301 = vmatprep.subr.mxu0 0.0
    %v302 = vand.u32 %v15, 4294901760
    %303 = vmatpush1.msra.mxu0 %v302
    %304 = vmatprep.subr.mxu0 0.0
    %v305 = vand.u32 %v16, 4294901760
    %306 = vmatpush1.msra.mxu0 %v305
    %307 = vmatprep.subr.mxu0 0.0
    %v308 = vand.u32 %v17, 4294901760
    %309 = vmatpush1.msra.mxu0 %v308
    %310 = vmatprep.subr.mxu0 0.0
    %311 = vmatpush1.msra.mxu0 0.0
    %312 = vmatprep.subr.mxu0 0.0
    %313 = vmatpush1.msra.mxu0 0.0
    %314 = vmatprep.subr.mxu0 0.0
    %315 = vmatpush1.msra.mxu0 0.0
    %316 = vmatprep.subr.mxu0 0.0
    %317 = vmatpush1.msra.mxu0 0.0
    %318 = vmatprep.subr.mxu0 0.0
    %319 = vmatpush1.msra.mxu0 0.0
    %320 = vmatprep.subr.mxu0 0.0
    %321 = vmatpush1.msra.mxu0 0.0
    %322 = vmatprep.subr.mxu0 0.0
    %323 = vmatpush1.msra.mxu0 0.0
    %324 = vmatprep.subr.mxu0 0.0
    %325 = vmatpush1.msra.mxu0 0.0
    %326 = vmatprep.subr.mxu0 0.0
    %327 = vmatpush1.msra.mxu0 0.0
    %328 = vmatprep.subr.mxu0 0.0
    %329 = vmatpush1.msra.mxu0 0.0
    %330 = vmatprep.subr.mxu0 0.0
    %331 = vmatpush1.msra.mxu0 0.0
    %332 = vmatprep.subr.mxu0 0.0
    %333 = vmatpush1.msra.mxu0 0.0
    %334 = vmatprep.subr.mxu0 0.0
    %335 = vmatpush1.msra.mxu0 0.0
    %336 = vmatprep.subr.mxu0 0.0
    %337 = vmatpush1.msra.mxu0 0.0
    %338 = vmatprep.subr.mxu0 0.0
    %339 = vmatpush1.msra.mxu0 0.0
    %340 = vmatprep.subr.mxu0 0.0
    %341 = vmatpush1.msra.mxu0 0.0
    %342 = vmatprep.subr.mxu0 0.0
    %343 = vmatpush1.msra.mxu0 0.0
    %344 = vmatprep.subr.mxu0 0.0
    %345 = vmatpush1.msra.mxu0 0.0
    %346 = vmatprep.subr.mxu0 0.0
    %347 = vmatpush1.msra.mxu0 0.0
    %348 = vmatprep.subr.mxu0 0.0
    %349 = vmatpush1.msra.mxu0 0.0
    %350 = vmatprep.subr.mxu0 0.0
    %351 = vmatpush1.msra.mxu0 0.0
    %352 = vmatprep.subr.mxu0 0.0
    %353 = vmatpush1.msra.mxu0 0.0
    %354 = vmatprep.subr.mxu0 0.0
    %355 = vmatpush1.msra.mxu0 0.0
    %356 = vmatprep.subr.mxu0 0.0
    %357 = vmatpush1.msra.mxu0 0.0
    %358 = vmatprep.subr.mxu0 0.0
    %359 = vmatpush1.msra.mxu0 0.0
    %360 = vmatprep.subr.mxu0 0.0
    %361 = vmatpush1.msra.mxu0 0.0
    %362 = vmatprep.subr.mxu0 0.0
    %363 = vmatpush1.msra.mxu0 0.0
    %364 = vmatprep.subr.mxu0 0.0
    %365 = vmatpush1.msra.mxu0 0.0
    %366 = vmatprep.mubr.f32.mxu0 0.0
    %v367 = vand.u32 %v20, 4294901760
    %v368 = vsub.f32 %v20, %v367
    %v369 = vand.u32 %v368, 4294901760
    %370 = vmatmul.mubr.f32.gmra.mrb[0].mxu0 %v369
    %v371 = vpop.f32.mrb[0].mxu0
    %v372 = vadd.f32 %v288, %v371
    %v373 = vpop.f32.mrb[0].mxu0
    %374 = vmatprep.mubr.f32.mxu0 0.0
    %v375 = vand.u32 %v23, 4294901760
    %v376 = vsub.f32 %v23, %v375
    %v377 = vand.u32 %v376, 4294901760
    %378 = vmatmul.mubr.f32.gmra.mrb[0].mxu0 %v377
    %v379 = vpop.f32.mrb[0].mxu0
    %v380 = vadd.f32 %v295, %v379
    %v381 = vpop.f32.mrb[0].mxu0
    %382 = vdwg.mxu0
    %383 = vmatprep.subr.mxu0 0.0
    %v384 = vand.u32 %v14, 4294901760
    %v385 = vsub.f32 %v14, %v384
    %v386 = vand.u32 %v385, 4294901760
    %387 = vmatpush1.msra.mxu0 %v386
    %388 = vmatprep.subr.mxu0 0.0
    %v389 = vand.u32 %v15, 4294901760
    %v390 = vsub.f32 %v15, %v389
    %v391 = vand.u32 %v390, 4294901760
    %392 = vmatpush1.msra.mxu0 %v391
    %393 = vmatprep.subr.mxu0 0.0
    %v394 = vand.u32 %v16, 4294901760
    %v395 = vsub.f32 %v16, %v394
    %v396 = vand.u32 %v395, 4294901760
    %397 = vmatpush1.msra.mxu0 %v396
    %398 = vmatprep.subr.mxu0 0.0
    %v399 = vand.u32 %v17, 4294901760
    %v400 = vsub.f32 %v17, %v399
    %v401 = vand.u32 %v400, 4294901760
    %402 = vmatpush1.msra.mxu0 %v401
    %403 = vmatprep.subr.mxu0 0.0
    %404 = vmatpush1.msra.mxu0 0.0
    %405 = vmatprep.subr.mxu0 0.0
    %406 = vmatpush1.msra.mxu0 0.0
    %407 = vmatprep.subr.mxu0 0.0
    %408 = vmatpush1.msra.mxu0 0.0
    %409 = vmatprep.subr.mxu0 0.0
    %410 = vmatpush1.msra.mxu0 0.0
    %411 = vmatprep.subr.mxu0 0.0
    %412 = vmatpush1.msra.mxu0 0.0
    %413 = vmatprep.subr.mxu0 0.0
    %414 = vmatpush1.msra.mxu0 0.0
    %415 = vmatprep.subr.mxu0 0.0
    %416 = vmatpush1.msra.mxu0 0.0
    %417 = vmatprep.subr.mxu0 0.0
    %418 = vmatpush1.msra.mxu0 0.0
    %419 = vmatprep.subr.mxu0 0.0
    %420 = vmatpush1.msra.mxu0 0.0
    %421 = vmatprep.subr.mxu0 0.0
    %422 = vmatpush1.msra.mxu0 0.0
    %423 = vmatprep.subr.mxu0 0.0
    %424 = vmatpush1.msra.mxu0 0.0
    %425 = vmatprep.subr.mxu0 0.0
    %426 = vmatpush1.msra.mxu0 0.0
    %427 = vmatprep.subr.mxu0 0.0
    %428 = vmatpush1.msra.mxu0 0.0
    %429 = vmatprep.subr.mxu0 0.0
    %430 = vmatpush1.msra.mxu0 0.0
    %431 = vmatprep.subr.mxu0 0.0
    %432 = vmatpush1.msra.mxu0 0.0
    %433 = vmatprep.subr.mxu0 0.0
    %434 = vmatpush1.msra.mxu0 0.0
    %435 = vmatprep.subr.mxu0 0.0
    %436 = vmatpush1.msra.mxu0 0.0
    %437 = vmatprep.subr.mxu0 0.0
    %438 = vmatpush1.msra.mxu0 0.0
    %439 = vmatprep.subr.mxu0 0.0
    %440 = vmatpush1.msra.mxu0 0.0
    %441 = vmatprep.subr.mxu0 0.0
    %442 = vmatpush1.msra.mxu0 0.0
    %443 = vmatprep.subr.mxu0 0.0
    %444 = vmatpush1.msra.mxu0 0.0
    %445 = vmatprep.subr.mxu0 0.0
    %446 = vmatpush1.msra.mxu0 0.0
    %447 = vmatprep.subr.mxu0 0.0
    %448 = vmatpush1.msra.mxu0 0.0
    %449 = vmatprep.subr.mxu0 0.0
    %450 = vmatpush1.msra.mxu0 0.0
    %451 = vmatprep.subr.mxu0 0.0
    %452 = vmatpush1.msra.mxu0 0.0
    %453 = vmatprep.subr.mxu0 0.0
    %454 = vmatpush1.msra.mxu0 0.0
    %455 = vmatprep.subr.mxu0 0.0
    %456 = vmatpush1.msra.mxu0 0.0
    %457 = vmatprep.subr.mxu0 0.0
    %458 = vmatpush1.msra.mxu0 0.0
    %459 = vmatprep.mubr.f32.mxu0 0.0
    %v460 = vand.u32 %v20, 4294901760
    %461 = vmatmul.mubr.f32.gmra.mrb[0].mxu0 %v460
    %v462 = vpop.f32.mrb[0].mxu0
    %v463 = vadd.f32 %v372, %v462
    %v464 = vpop.f32.mrb[0].mxu0
    %465 = vmatprep.mubr.f32.mxu0 0.0
    %v466 = vand.u32 %v23, 4294901760
    %467 = vmatmul.mubr.f32.gmra.mrb[0].mxu0 %v466
    %v468 = vpop.f32.mrb[0].mxu0
    %v469 = vadd.f32 %v380, %v468
    %v470 = vpop.f32.mrb[0].mxu0
    %471 = vdwg.mxu0
    %472 = vmatprep.subr.mxu0 0.0
    %v473 = vand.u32 %v14, 4294901760
    %474 = vmatpush1.msra.mxu0 %v473
    %475 = vmatprep.subr.mxu0 0.0
    %v476 = vand.u32 %v15, 4294901760
    %477 = vmatpush1.msra.mxu0 %v476
    %478 = vmatprep.subr.mxu0 0.0
    %v479 = vand.u32 %v16, 4294901760
    %480 = vmatpush1.msra.mxu0 %v479
    %481 = vmatprep.subr.mxu0 0.0
    %v482 = vand.u32 %v17, 4294901760
    %483 = vmatpush1.msra.mxu0 %v482
    %484 = vmatprep.subr.mxu0 0.0
    %485 = vmatpush1.msra.mxu0 0.0
    %486 = vmatprep.subr.mxu0 0.0
    %487 = vmatpush1.msra.mxu0 0.0
    %488 = vmatprep.subr.mxu0 0.0
    %489 = vmatpush1.msra.mxu0 0.0
    %490 = vmatprep.subr.mxu0 0.0
    %491 = vmatpush1.msra.mxu0 0.0
    %492 = vmatprep.subr.mxu0 0.0
    %493 = vmatpush1.msra.mxu0 0.0
    %494 = vmatprep.subr.mxu0 0.0
    %495 = vmatpush1.msra.mxu0 0.0
    %496 = vmatprep.subr.mxu0 0.0
    %497 = vmatpush1.msra.mxu0 0.0
    %498 = vmatprep.subr.mxu0 0.0
    %499 = vmatpush1.msra.mxu0 0.0
    %500 = vmatprep.subr.mxu0 0.0
    %501 = vmatpush1.msra.mxu0 0.0
    %502 = vmatprep.subr.mxu0 0.0
    %503 = vmatpush1.msra.mxu0 0.0
    %504 = vmatprep.subr.mxu0 0.0
    %505 = vmatpush1.msra.mxu0 0.0
    %506 = vmatprep.subr.mxu0 0.0
    %507 = vmatpush1.msra.mxu0 0.0
    %508 = vmatprep.subr.mxu0 0.0
    %509 = vmatpush1.msra.mxu0 0.0
    %510 = vmatprep.subr.mxu0 0.0
    %511 = vmatpush1.msra.mxu0 0.0
    %512 = vmatprep.subr.mxu0 0.0
    %513 = vmatpush1.msra.mxu0 0.0
    %514 = vmatprep.subr.mxu0 0.0
    %515 = vmatpush1.msra.mxu0 0.0
    %516 = vmatprep.subr.mxu0 0.0
    %517 = vmatpush1.msra.mxu0 0.0
    %518 = vmatprep.subr.mxu0 0.0
    %519 = vmatpush1.msra.mxu0 0.0
    %520 = vmatprep.subr.mxu0 0.0
    %521 = vmatpush1.msra.mxu0 0.0
    %522 = vmatprep.subr.mxu0 0.0
    %523 = vmatpush1.msra.mxu0 0.0
    %524 = vmatprep.subr.mxu0 0.0
    %525 = vmatpush1.msra.mxu0 0.0
    %526 = vmatprep.subr.mxu0 0.0
    %527 = vmatpush1.msra.mxu0 0.0
    %528 = vmatprep.subr.mxu0 0.0
    %529 = vmatpush1.msra.mxu0 0.0
    %530 = vmatprep.subr.mxu0 0.0
    %531 = vmatpush1.msra.mxu0 0.0
    %532 = vmatprep.subr.mxu0 0.0
    %533 = vmatpush1.msra.mxu0 0.0
    %534 = vmatprep.subr.mxu0 0.0
    %535 = vmatpush1.msra.mxu0 0.0
    %536 = vmatprep.subr.mxu0 0.0
    %537 = vmatpush1.msra.mxu0 0.0
    %538 = vmatprep.subr.mxu0 0.0
    %539 = vmatpush1.msra.mxu0 0.0
    %540 = vmatprep.mubr.f32.mxu0 0.0
    %v541 = vand.u32 %v20, 4294901760
    %542 = vmatmul.mubr.f32.gmra.mrb[0].mxu0 %v541
    %v543 = vpop.f32.mrb[0].mxu0
    %v544 = vadd.f32 %v463, %v543
    %v545 = vpop.f32.mrb[0].mxu0
    %546 = vmatprep.mubr.f32.mxu0 0.0
    %v547 = vand.u32 %v23, 4294901760
    %548 = vmatmul.mubr.f32.gmra.mrb[0].mxu0 %v547
    %v549 = vpop.f32.mrb[0].mxu0
    %v550 = vadd.f32 %v469, %v549
    %v551 = vpop.f32.mrb[0].mxu0
    %552 = vdwg.mxu0
    %555 = vset.pattern.permute.xlu0 0
    %556 = vperm.xlu0 %555, %v544
    %v557 = vpop.permute.xlu0 %556
    %558 = vset.pattern.permute.xlu0 0
    %559 = vperm.xlu0 %558, %v550
    %v560 = vpop.permute.xlu0 %559
    %v561 = vlaneseq
    %v562 = vand.u32 %v561, 127
    %v563 = vlaneseq
    %v564 = vshrl.u32 %v563, 7
    %v565 = vsub.s32 %v562, %v564
    %v566 = vrot.slane %v557, %v565
    %v567 = vlaneseq
    %v568 = vshrl.u32 %v567, 7
    %v569 = vsub.s32 %v562, %v568
    %v570 = vrot.slane %v560, %v569
    %vm571 = vcmask 1041409
    %v572 = vsel %vm571, %v570, %v566
    %vm574 = vcmask 58368
    %v575 = vsel %vm574, %v572, -inf
    %576 = vmax.xlane.f32.xlu0 %v575
    %v577 = vpop.xlane.xlu0 %576
    %v579 = vlaneseq
    %v580 = vshrl.u32 %v579, 7
    %v581 = vsub.s32 0, %v580
    %v582 = vrot.slane %v577, %v581
    %v583 = vlaneseq
    %v584 = vshrl.u32 %v583, 7
    %v585 = vsub.s32 1, %v584
    %v586 = vrot.slane %v577, %v585
    %v589 = vsub.f32 %v544, %v582
    %v590 = vsub.f32 %v550, %v586
    %v591 = vmul.f32 %v589, 1.442695
    %v592 = vpow.pop %v591
    %v593 = vmul.f32 %v590, 1.442695
    %v594 = vpow.pop %v593
    %597 = vset.pattern.permute.xlu0 0
    %598 = vperm.xlu0 %597, %v592
    %v599 = vpop.permute.xlu0 %598
    %600 = vset.pattern.permute.xlu0 0
    %601 = vperm.xlu0 %600, %v594
    %v602 = vpop.permute.xlu0 %601
    %v603 = vlaneseq
    %v604 = vshrl.u32 %v603, 7
    %v605 = vsub.s32 %v562, %v604
    %v606 = vrot.slane %v599, %v605
    %v607 = vlaneseq
    %v608 = vshrl.u32 %v607, 7
    %v609 = vsub.s32 %v562, %v608
    %v610 = vrot.slane %v602, %v609
    %v611 = vsel %vm571, %v610, %v606
    %v613 = vsel %vm574, %v611, 0.0
    %614 = vadd.xlane.f32.xlu0 %v613
    %v615 = vpop.xlane.xlu0 %614
    %vm616 = vcmask 64512
    %v617 = vsel %vm616, %v606, 0
    %619 = vmatprep.subr.mxu0 0.0
    %v620 = vand.u32 %v12, 4294901760
    %621 = vmatpush1.msra.mxu0 %v620
    %622 = vmatprep.subr.mxu0 0.0
    %623 = vmatpush1.msra.mxu0 0.0
    %624 = vmatprep.subr.mxu0 0.0
    %625 = vmatpush1.msra.mxu0 0.0
    %626 = vmatprep.subr.mxu0 0.0
    %627 = vmatpush1.msra.mxu0 0.0
    %628 = vmatprep.subr.mxu0 0.0
    %629 = vmatpush1.msra.mxu0 0.0
    %630 = vmatprep.subr.mxu0 0.0
    %631 = vmatpush1.msra.mxu0 0.0
    %632 = vmatprep.subr.mxu0 0.0
    %633 = vmatpush1.msra.mxu0 0.0
    %634 = vmatprep.subr.mxu0 0.0
    %635 = vmatpush1.msra.mxu0 0.0
    %636 = vmatprep.subr.mxu0 0.0
    %637 = vmatpush1.msra.mxu0 0.0
    %638 = vmatprep.subr.mxu0 0.0
    %639 = vmatpush1.msra.mxu0 0.0
    %640 = vmatprep.subr.mxu0 0.0
    %641 = vmatpush1.msra.mxu0 0.0
    %642 = vmatprep.subr.mxu0 0.0
    %643 = vmatpush1.msra.mxu0 0.0
    %644 = vmatprep.subr.mxu0 0.0
    %645 = vmatpush1.msra.mxu0 0.0
    %646 = vmatprep.subr.mxu0 0.0
    %647 = vmatpush1.msra.mxu0 0.0
    %648 = vmatprep.subr.mxu0 0.0
    %649 = vmatpush1.msra.mxu0 0.0
    %650 = vmatprep.subr.mxu0 0.0
    %651 = vmatpush1.msra.mxu0 0.0
    %652 = vmatprep.subr.mxu0 0.0
    %653 = vmatpush1.msra.mxu0 0.0
    %654 = vmatprep.subr.mxu0 0.0
    %655 = vmatpush1.msra.mxu0 0.0
    %656 = vmatprep.subr.mxu0 0.0
    %657 = vmatpush1.msra.mxu0 0.0
    %658 = vmatprep.subr.mxu0 0.0
    %659 = vmatpush1.msra.mxu0 0.0
    %660 = vmatprep.subr.mxu0 0.0
    %661 = vmatpush1.msra.mxu0 0.0
    %662 = vmatprep.subr.mxu0 0.0
    %663 = vmatpush1.msra.mxu0 0.0
    %664 = vmatprep.subr.mxu0 0.0
    %665 = vmatpush1.msra.mxu0 0.0
    %666 = vmatprep.subr.mxu0 0.0
    %667 = vmatpush1.msra.mxu0 0.0
    %668 = vmatprep.subr.mxu0 0.0
    %669 = vmatpush1.msra.mxu0 0.0
    %670 = vmatprep.subr.mxu0 0.0
    %671 = vmatpush1.msra.mxu0 0.0
    %672 = vmatprep.subr.mxu0 0.0
    %673 = vmatpush1.msra.mxu0 0.0
    %674 = vmatprep.subr.mxu0 0.0
    %675 = vmatpush1.msra.mxu0 0.0
    %676 = vmatprep.subr.mxu0 0.0
    %677 = vmatpush1.msra.mxu0 0.0
    %678 = vmatprep.subr.mxu0 0.0
    %679 = vmatpush1.msra.mxu0 0.0
    %680 = vmatprep.subr.mxu0 0.0
    %681 = vmatpush1.msra.mxu0 0.0
    %682 = vmatprep.subr.mxu0 0.0
    %683 = vmatpush1.msra.mxu0 0.0
    %684 = vmatprep.mubr.f32.mxu0 0.0
    %v685 = vand.u32 %v617, 4294901760
    %v686 = vsub.f32 %v617, %v685
    %v687 = vand.u32 %v686, 4294901760
    %v688 = vsub.f32 %v686, %v687
    %v689 = vand.u32 %v688, 4294901760
    %690 = vmatmul.mubr.f32.gmra.mrb[0].mxu0 %v689
    %v691 = vpop.f32.mrb[0].mxu0
    %v692 = vadd.f32 0.0, %v691
    %v693 = vpop.f32.mrb[0].mxu0
    %694 = vdwg.mxu0
    %695 = vmatprep.subr.mxu0 0.0
    %v696 = vand.u32 %v12, 4294901760
    %v697 = vsub.f32 %v12, %v696
    %v698 = vand.u32 %v697, 4294901760
    %v699 = vsub.f32 %v697, %v698
    %v700 = vand.u32 %v699, 4294901760
    %701 = vmatpush1.msra.mxu0 %v700
    %702 = vmatprep.subr.mxu0 0.0
    %703 = vmatpush1.msra.mxu0 0.0
    %704 = vmatprep.subr.mxu0 0.0
    %705 = vmatpush1.msra.mxu0 0.0
    %706 = vmatprep.subr.mxu0 0.0
    %707 = vmatpush1.msra.mxu0 0.0
    %708 = vmatprep.subr.mxu0 0.0
    %709 = vmatpush1.msra.mxu0 0.0
    %710 = vmatprep.subr.mxu0 0.0
    %711 = vmatpush1.msra.mxu0 0.0
    %712 = vmatprep.subr.mxu0 0.0
    %713 = vmatpush1.msra.mxu0 0.0
    %714 = vmatprep.subr.mxu0 0.0
    %715 = vmatpush1.msra.mxu0 0.0
    %716 = vmatprep.subr.mxu0 0.0
    %717 = vmatpush1.msra.mxu0 0.0
    %718 = vmatprep.subr.mxu0 0.0
    %719 = vmatpush1.msra.mxu0 0.0
    %720 = vmatprep.subr.mxu0 0.0
    %721 = vmatpush1.msra.mxu0 0.0
    %722 = vmatprep.subr.mxu0 0.0
    %723 = vmatpush1.msra.mxu0 0.0
    %724 = vmatprep.subr.mxu0 0.0
    %725 = vmatpush1.msra.mxu0 0.0
    %726 = vmatprep.subr.mxu0 0.0
    %727 = vmatpush1.msra.mxu0 0.0
    %728 = vmatprep.subr.mxu0 0.0
    %729 = vmatpush1.msra.mxu0 0.0
    %730 = vmatprep.subr.mxu0 0.0
    %731 = vmatpush1.msra.mxu0 0.0
    %732 = vmatprep.subr.mxu0 0.0
    %733 = vmatpush1.msra.mxu0 0.0
    %734 = vmatprep.subr.mxu0 0.0
    %735 = vmatpush1.msra.mxu0 0.0
    %736 = vmatprep.subr.mxu0 0.0
    %737 = vmatpush1.msra.mxu0 0.0
    %738 = vmatprep.subr.mxu0 0.0
    %739 = vmatpush1.msra.mxu0 0.0
    %740 = vmatprep.subr.mxu0 0.0
    %741 = vmatpush1.msra.mxu0 0.0
    %742 = vmatprep.subr.mxu0 0.0
    %743 = vmatpush1.msra.mxu0 0.0
    %744 = vmatprep.subr.mxu0 0.0
    %745 = vmatpush1.msra.mxu0 0.0
    %746 = vmatprep.subr.mxu0 0.0
    %747 = vmatpush1.msra.mxu0 0.0
    %748 = vmatprep.subr.mxu0 0.0
    %749 = vmatpush1.msra.mxu0 0.0
    %750 = vmatprep.subr.mxu0 0.0
    %751 = vmatpush1.msra.mxu0 0.0
    %752 = vmatprep.subr.mxu0 0.0
    %753 = vmatpush1.msra.mxu0 0.0
    %754 = vmatprep.subr.mxu0 0.0
    %755 = vmatpush1.msra.mxu0 0.0
    %756 = vmatprep.subr.mxu0 0.0
    %757 = vmatpush1.msra.mxu0 0.0
    %758 = vmatprep.subr.mxu0 0.0
    %759 = vmatpush1.msra.mxu0 0.0
    %760 = vmatprep.subr.mxu0 0.0
    %761 = vmatpush1.msra.mxu0 0.0
    %762 = vmatprep.subr.mxu0 0.0
    %763 = vmatpush1.msra.mxu0 0.0
    %764 = vmatprep.mubr.f32.mxu0 0.0
    %v765 = vand.u32 %v617, 4294901760
    %766 = vmatmul.mubr.f32.gmra.mrb[0].mxu0 %v765
    %v767 = vpop.f32.mrb[0].mxu0
    %v768 = vadd.f32 %v692, %v767
    %v769 = vpop.f32.mrb[0].mxu0
    %770 = vdwg.mxu0
    %771 = vmatprep.subr.mxu0 0.0
    %v772 = vand.u32 %v12, 4294901760
    %v773 = vsub.f32 %v12, %v772
    %774 = vmatpush1.msra.mxu0 %v773
    %775 = vmatprep.subr.mxu0 0.0
    %776 = vmatpush1.msra.mxu0 0.0
    %777 = vmatprep.subr.mxu0 0.0
    %778 = vmatpush1.msra.mxu0 0.0
    %779 = vmatprep.subr.mxu0 0.0
    %780 = vmatpush1.msra.mxu0 0.0
    %781 = vmatprep.subr.mxu0 0.0
    %782 = vmatpush1.msra.mxu0 0.0
    %783 = vmatprep.subr.mxu0 0.0
    %784 = vmatpush1.msra.mxu0 0.0
    %785 = vmatprep.subr.mxu0 0.0
    %786 = vmatpush1.msra.mxu0 0.0
    %787 = vmatprep.subr.mxu0 0.0
    %788 = vmatpush1.msra.mxu0 0.0
    %789 = vmatprep.subr.mxu0 0.0
    %790 = vmatpush1.msra.mxu0 0.0
    %791 = vmatprep.subr.mxu0 0.0
    %792 = vmatpush1.msra.mxu0 0.0
    %793 = vmatprep.subr.mxu0 0.0
    %794 = vmatpush1.msra.mxu0 0.0
    %795 = vmatprep.subr.mxu0 0.0
    %796 = vmatpush1.msra.mxu0 0.0
    %797 = vmatprep.subr.mxu0 0.0
    %798 = vmatpush1.msra.mxu0 0.0
    %799 = vmatprep.subr.mxu0 0.0
    %800 = vmatpush1.msra.mxu0 0.0
    %801 = vmatprep.subr.mxu0 0.0
    %802 = vmatpush1.msra.mxu0 0.0
    %803 = vmatprep.subr.mxu0 0.0
    %804 = vmatpush1.msra.mxu0 0.0
    %805 = vmatprep.subr.mxu0 0.0
    %806 = vmatpush1.msra.mxu0 0.0
    %807 = vmatprep.subr.mxu0 0.0
    %808 = vmatpush1.msra.mxu0 0.0
    %809 = vmatprep.subr.mxu0 0.0
    %810 = vmatpush1.msra.mxu0 0.0
    %811 = vmatprep.subr.mxu0 0.0
    %812 = vmatpush1.msra.mxu0 0.0
    %813 = vmatprep.subr.mxu0 0.0
    %814 = vmatpush1.msra.mxu0 0.0
    %815 = vmatprep.subr.mxu0 0.0
    %816 = vmatpush1.msra.mxu0 0.0
    %817 = vmatprep.subr.mxu0 0.0
    %818 = vmatpush1.msra.mxu0 0.0
    %819 = vmatprep.subr.mxu0 0.0
    %820 = vmatpush1.msra.mxu0 0.0
    %821 = vmatprep.subr.mxu0 0.0
    %822 = vmatpush1.msra.mxu0 0.0
    %823 = vmatprep.subr.mxu0 0.0
    %824 = vmatpush1.msra.mxu0 0.0
    %825 = vmatprep.subr.mxu0 0.0
    %826 = vmatpush1.msra.mxu0 0.0
    %827 = vmatprep.subr.mxu0 0.0
    %828 = vmatpush1.msra.mxu0 0.0
    %829 = vmatprep.subr.mxu0 0.0
    %830 = vmatpush1.msra.mxu0 0.0
    %831 = vmatprep.subr.mxu0 0.0
    %832 = vmatpush1.msra.mxu0 0.0
    %833 = vmatprep.subr.mxu0 0.0
    %834 = vmatpush1.msra.mxu0 0.0
    %835 = vmatprep.subr.mxu0 0.0
    %836 = vmatpush1.msra.mxu0 0.0
    %837 = vmatprep.mubr.f32.mxu0 0.0
    %v838 = vand.u32 %v617, 4294901760
    %v839 = vsub.f32 %v617, %v838
    %840 = vmatmul.mubr.f32.gmra.mrb[0].mxu0 %v839
    %v841 = vpop.f32.mrb[0].mxu0
    %v842 = vadd.f32 %v768, %v841
    %v843 = vpop.f32.mrb[0].mxu0
    %844 = vdwg.mxu0
    %845 = vmatprep.subr.mxu0 0.0
    %v846 = vand.u32 %v12, 4294901760
    %847 = vmatpush1.msra.mxu0 %v846
    %848 = vmatprep.subr.mxu0 0.0
    %849 = vmatpush1.msra.mxu0 0.0
    %850 = vmatprep.subr.mxu0 0.0
    %851 = vmatpush1.msra.mxu0 0.0
    %852 = vmatprep.subr.mxu0 0.0
    %853 = vmatpush1.msra.mxu0 0.0
    %854 = vmatprep.subr.mxu0 0.0
    %855 = vmatpush1.msra.mxu0 0.0
    %856 = vmatprep.subr.mxu0 0.0
    %857 = vmatpush1.msra.mxu0 0.0
    %858 = vmatprep.subr.mxu0 0.0
    %859 = vmatpush1.msra.mxu0 0.0
    %860 = vmatprep.subr.mxu0 0.0
    %861 = vmatpush1.msra.mxu0 0.0
    %862 = vmatprep.subr.mxu0 0.0
    %863 = vmatpush1.msra.mxu0 0.0
    %864 = vmatprep.subr.mxu0 0.0
    %865 = vmatpush1.msra.mxu0 0.0
    %866 = vmatprep.subr.mxu0 0.0
    %867 = vmatpush1.msra.mxu0 0.0
    %868 = vmatprep.subr.mxu0 0.0
    %869 = vmatpush1.msra.mxu0 0.0
    %870 = vmatprep.subr.mxu0 0.0
    %871 = vmatpush1.msra.mxu0 0.0
    %872 = vmatprep.subr.mxu0 0.0
    %873 = vmatpush1.msra.mxu0 0.0
    %874 = vmatprep.subr.mxu0 0.0
    %875 = vmatpush1.msra.mxu0 0.0
    %876 = vmatprep.subr.mxu0 0.0
    %877 = vmatpush1.msra.mxu0 0.0
    %878 = vmatprep.subr.mxu0 0.0
    %879 = vmatpush1.msra.mxu0 0.0
    %880 = vmatprep.subr.mxu0 0.0
    %881 = vmatpush1.msra.mxu0 0.0
    %882 = vmatprep.subr.mxu0 0.0
    %883 = vmatpush1.msra.mxu0 0.0
    %884 = vmatprep.subr.mxu0 0.0
    %885 = vmatpush1.msra.mxu0 0.0
    %886 = vmatprep.subr.mxu0 0.0
    %887 = vmatpush1.msra.mxu0 0.0
    %888 = vmatprep.subr.mxu0 0.0
    %889 = vmatpush1.msra.mxu0 0.0
    %890 = vmatprep.subr.mxu0 0.0
    %891 = vmatpush1.msra.mxu0 0.0
    %892 = vmatprep.subr.mxu0 0.0
    %893 = vmatpush1.msra.mxu0 0.0
    %894 = vmatprep.subr.mxu0 0.0
    %895 = vmatpush1.msra.mxu0 0.0
    %896 = vmatprep.subr.mxu0 0.0
    %897 = vmatpush1.msra.mxu0 0.0
    %898 = vmatprep.subr.mxu0 0.0
    %899 = vmatpush1.msra.mxu0 0.0
    %900 = vmatprep.subr.mxu0 0.0
    %901 = vmatpush1.msra.mxu0 0.0
    %902 = vmatprep.subr.mxu0 0.0
    %903 = vmatpush1.msra.mxu0 0.0
    %904 = vmatprep.subr.mxu0 0.0
    %905 = vmatpush1.msra.mxu0 0.0
    %906 = vmatprep.subr.mxu0 0.0
    %907 = vmatpush1.msra.mxu0 0.0
    %908 = vmatprep.subr.mxu0 0.0
    %909 = vmatpush1.msra.mxu0 0.0
    %910 = vmatprep.mubr.f32.mxu0 0.0
    %v911 = vand.u32 %v617, 4294901760
    %v912 = vsub.f32 %v617, %v911
    %v913 = vand.u32 %v912, 4294901760
    %914 = vmatmul.mubr.f32.gmra.mrb[0].mxu0 %v913
    %v915 = vpop.f32.mrb[0].mxu0
    %v916 = vadd.f32 %v842, %v915
    %v917 = vpop.f32.mrb[0].mxu0
    %918 = vdwg.mxu0
    %919 = vmatprep.subr.mxu0 0.0
    %v920 = vand.u32 %v12, 4294901760
    %v921 = vsub.f32 %v12, %v920
    %v922 = vand.u32 %v921, 4294901760
    %923 = vmatpush1.msra.mxu0 %v922
    %924 = vmatprep.subr.mxu0 0.0
    %925 = vmatpush1.msra.mxu0 0.0
    %926 = vmatprep.subr.mxu0 0.0
    %927 = vmatpush1.msra.mxu0 0.0
    %928 = vmatprep.subr.mxu0 0.0
    %929 = vmatpush1.msra.mxu0 0.0
    %930 = vmatprep.subr.mxu0 0.0
    %931 = vmatpush1.msra.mxu0 0.0
    %932 = vmatprep.subr.mxu0 0.0
    %933 = vmatpush1.msra.mxu0 0.0
    %934 = vmatprep.subr.mxu0 0.0
    %935 = vmatpush1.msra.mxu0 0.0
    %936 = vmatprep.subr.mxu0 0.0
    %937 = vmatpush1.msra.mxu0 0.0
    %938 = vmatprep.subr.mxu0 0.0
    %939 = vmatpush1.msra.mxu0 0.0
    %940 = vmatprep.subr.mxu0 0.0
    %941 = vmatpush1.msra.mxu0 0.0
    %942 = vmatprep.subr.mxu0 0.0
    %943 = vmatpush1.msra.mxu0 0.0
    %944 = vmatprep.subr.mxu0 0.0
    %945 = vmatpush1.msra.mxu0 0.0
    %946 = vmatprep.subr.mxu0 0.0
    %947 = vmatpush1.msra.mxu0 0.0
    %948 = vmatprep.subr.mxu0 0.0
    %949 = vmatpush1.msra.mxu0 0.0
    %950 = vmatprep.subr.mxu0 0.0
    %951 = vmatpush1.msra.mxu0 0.0
    %952 = vmatprep.subr.mxu0 0.0
    %953 = vmatpush1.msra.mxu0 0.0
    %954 = vmatprep.subr.mxu0 0.0
    %955 = vmatpush1.msra.mxu0 0.0
    %956 = vmatprep.subr.mxu0 0.0
    %957 = vmatpush1.msra.mxu0 0.0
    %958 = vmatprep.subr.mxu0 0.0
    %959 = vmatpush1.msra.mxu0 0.0
    %960 = vmatprep.subr.mxu0 0.0
    %961 = vmatpush1.msra.mxu0 0.0
    %962 = vmatprep.subr.mxu0 0.0
    %963 = vmatpush1.msra.mxu0 0.0
    %964 = vmatprep.subr.mxu0 0.0
    %965 = vmatpush1.msra.mxu0 0.0
    %966 = vmatprep.subr.mxu0 0.0
    %967 = vmatpush1.msra.mxu0 0.0
    %968 = vmatprep.subr.mxu0 0.0
    %969 = vmatpush1.msra.mxu0 0.0
    %970 = vmatprep.subr.mxu0 0.0
    %971 = vmatpush1.msra.mxu0 0.0
    %972 = vmatprep.subr.mxu0 0.0
    %973 = vmatpush1.msra.mxu0 0.0
    %974 = vmatprep.subr.mxu0 0.0
    %975 = vmatpush1.msra.mxu0 0.0
    %976 = vmatprep.subr.mxu0 0.0
    %977 = vmatpush1.msra.mxu0 0.0
    %978 = vmatprep.subr.mxu0 0.0
    %979 = vmatpush1.msra.mxu0 0.0
    %980 = vmatprep.subr.mxu0 0.0
    %981 = vmatpush1.msra.mxu0 0.0
    %982 = vmatprep.subr.mxu0 0.0
    %983 = vmatpush1.msra.mxu0 0.0
    %984 = vmatprep.subr.mxu0 0.0
    %985 = vmatpush1.msra.mxu0 0.0
    %986 = vmatprep.mubr.f32.mxu0 0.0
    %v987 = vand.u32 %v617, 4294901760
    %988 = vmatmul.mubr.f32.gmra.mrb[0].mxu0 %v987
    %v989 = vpop.f32.mrb[0].mxu0
    %v990 = vadd.f32 %v916, %v989
    %v991 = vpop.f32.mrb[0].mxu0
    %992 = vdwg.mxu0
    %993 = vmatprep.subr.mxu0 0.0
    %v994 = vand.u32 %v12, 4294901760
    %995 = vmatpush1.msra.mxu0 %v994
    %996 = vmatprep.subr.mxu0 0.0
    %997 = vmatpush1.msra.mxu0 0.0
    %998 = vmatprep.subr.mxu0 0.0
    %999 = vmatpush1.msra.mxu0 0.0
    %1000 = vmatprep.subr.mxu0 0.0
    %1001 = vmatpush1.msra.mxu0 0.0
    %1002 = vmatprep.subr.mxu0 0.0
    %1003 = vmatpush1.msra.mxu0 0.0
    %1004 = vmatprep.subr.mxu0 0.0
    %1005 = vmatpush1.msra.mxu0 0.0
    %1006 = vmatprep.subr.mxu0 0.0
    %1007 = vmatpush1.msra.mxu0 0.0
    %1008 = vmatprep.subr.mxu0 0.0
    %1009 = vmatpush1.msra.mxu0 0.0
    %1010 = vmatprep.subr.mxu0 0.0
    %1011 = vmatpush1.msra.mxu0 0.0
    %1012 = vmatprep.subr.mxu0 0.0
    %1013 = vmatpush1.msra.mxu0 0.0
    %1014 = vmatprep.subr.mxu0 0.0
    %1015 = vmatpush1.msra.mxu0 0.0
    %1016 = vmatprep.subr.mxu0 0.0
    %1017 = vmatpush1.msra.mxu0 0.0
    %1018 = vmatprep.subr.mxu0 0.0
    %1019 = vmatpush1.msra.mxu0 0.0
    %1020 = vmatprep.subr.mxu0 0.0
    %1021 = vmatpush1.msra.mxu0 0.0
    %1022 = vmatprep.subr.mxu0 0.0
    %1023 = vmatpush1.msra.mxu0 0.0
    %1024 = vmatprep.subr.mxu0 0.0
    %1025 = vmatpush1.msra.mxu0 0.0
    %1026 = vmatprep.subr.mxu0 0.0
    %1027 = vmatpush1.msra.mxu0 0.0
    %1028 = vmatprep.subr.mxu0 0.0
    %1029 = vmatpush1.msra.mxu0 0.0
    %1030 = vmatprep.subr.mxu0 0.0
    %1031 = vmatpush1.msra.mxu0 0.0
    %1032 = vmatprep.subr.mxu0 0.0
    %1033 = vmatpush1.msra.mxu0 0.0
    %1034 = vmatprep.subr.mxu0 0.0
    %1035 = vmatpush1.msra.mxu0 0.0
    %1036 = vmatprep.subr.mxu0 0.0
    %1037 = vmatpush1.msra.mxu0 0.0
    %1038 = vmatprep.subr.mxu0 0.0
    %1039 = vmatpush1.msra.mxu0 0.0
    %1040 = vmatprep.subr.mxu0 0.0
    %1041 = vmatpush1.msra.mxu0 0.0
    %1042 = vmatprep.subr.mxu0 0.0
    %1043 = vmatpush1.msra.mxu0 0.0
    %1044 = vmatprep.subr.mxu0 0.0
    %1045 = vmatpush1.msra.mxu0 0.0
    %1046 = vmatprep.subr.mxu0 0.0
    %1047 = vmatpush1.msra.mxu0 0.0
    %1048 = vmatprep.subr.mxu0 0.0
    %1049 = vmatpush1.msra.mxu0 0.0
    %1050 = vmatprep.subr.mxu0 0.0
    %1051 = vmatpush1.msra.mxu0 0.0
    %1052 = vmatprep.subr.mxu0 0.0
    %1053 = vmatpush1.msra.mxu0 0.0
    %1054 = vmatprep.subr.mxu0 0.0
    %1055 = vmatpush1.msra.mxu0 0.0
    %1056 = vmatprep.subr.mxu0 0.0
    %1057 = vmatpush1.msra.mxu0 0.0
    %1058 = vmatprep.mubr.f32.mxu0 0.0
    %v1059 = vand.u32 %v617, 4294901760
    %1060 = vmatmul.mubr.f32.gmra.mrb[0].mxu0 %v1059
    %v1061 = vpop.f32.mrb[0].mxu0
    %v1062 = vadd.f32 %v990, %v1061
    %v1063 = vpop.f32.mrb[0].mxu0
    %1064 = vdwg.mxu0
    %v1065 = vsel %vm616, %v610, 0
    %1067 = vmatprep.subr.mxu0 0.0
    %v1068 = vand.u32 %v13, 4294901760
    %1069 = vmatpush1.msra.mxu0 %v1068
    %1070 = vmatprep.subr.mxu0 0.0
    %1071 = vmatpush1.msra.mxu0 0.0
    %1072 = vmatprep.subr.mxu0 0.0
    %1073 = vmatpush1.msra.mxu0 0.0
    %1074 = vmatprep.subr.mxu0 0.0
    %1075 = vmatpush1.msra.mxu0 0.0
    %1076 = vmatprep.subr.mxu0 0.0
    %1077 = vmatpush1.msra.mxu0 0.0
    %1078 = vmatprep.subr.mxu0 0.0
    %1079 = vmatpush1.msra.mxu0 0.0
    %1080 = vmatprep.subr.mxu0 0.0
    %1081 = vmatpush1.msra.mxu0 0.0
    %1082 = vmatprep.subr.mxu0 0.0
    %1083 = vmatpush1.msra.mxu0 0.0
    %1084 = vmatprep.subr.mxu0 0.0
    %1085 = vmatpush1.msra.mxu0 0.0
    %1086 = vmatprep.subr.mxu0 0.0
    %1087 = vmatpush1.msra.mxu0 0.0
    %1088 = vmatprep.subr.mxu0 0.0
    %1089 = vmatpush1.msra.mxu0 0.0
    %1090 = vmatprep.subr.mxu0 0.0
    %1091 = vmatpush1.msra.mxu0 0.0
    %1092 = vmatprep.subr.mxu0 0.0
    %1093 = vmatpush1.msra.mxu0 0.0
    %1094 = vmatprep.subr.mxu0 0.0
    %1095 = vmatpush1.msra.mxu0 0.0
    %1096 = vmatprep.subr.mxu0 0.0
    %1097 = vmatpush1.msra.mxu0 0.0
    %1098 = vmatprep.subr.mxu0 0.0
    %1099 = vmatpush1.msra.mxu0 0.0
    %1100 = vmatprep.subr.mxu0 0.0
    %1101 = vmatpush1.msra.mxu0 0.0
    %1102 = vmatprep.subr.mxu0 0.0
    %1103 = vmatpush1.msra.mxu0 0.0
    %1104 = vmatprep.subr.mxu0 0.0
    %1105 = vmatpush1.msra.mxu0 0.0
    %1106 = vmatprep.subr.mxu0 0.0
    %1107 = vmatpush1.msra.mxu0 0.0
    %1108 = vmatprep.subr.mxu0 0.0
    %1109 = vmatpush1.msra.mxu0 0.0
    %1110 = vmatprep.subr.mxu0 0.0
    %1111 = vmatpush1.msra.mxu0 0.0
    %1112 = vmatprep.subr.mxu0 0.0
    %1113 = vmatpush1.msra.mxu0 0.0
    %1114 = vmatprep.subr.mxu0 0.0
    %1115 = vmatpush1.msra.mxu0 0.0
    %1116 = vmatprep.subr.mxu0 0.0
    %1117 = vmatpush1.msra.mxu0 0.0
    %1118 = vmatprep.subr.mxu0 0.0
    %1119 = vmatpush1.msra.mxu0 0.0
    %1120 = vmatprep.subr.mxu0 0.0
    %1121 = vmatpush1.msra.mxu0 0.0
    %1122 = vmatprep.subr.mxu0 0.0
    %1123 = vmatpush1.msra.mxu0 0.0
    %1124 = vmatprep.subr.mxu0 0.0
    %1125 = vmatpush1.msra.mxu0 0.0
    %1126 = vmatprep.subr.mxu0 0.0
    %1127 = vmatpush1.msra.mxu0 0.0
    %1128 = vmatprep.subr.mxu0 0.0
    %1129 = vmatpush1.msra.mxu0 0.0
    %1130 = vmatprep.subr.mxu0 0.0
    %1131 = vmatpush1.msra.mxu0 0.0
    %1132 = vmatprep.mubr.f32.mxu0 0.0
    %v1133 = vand.u32 %v1065, 4294901760
    %v1134 = vsub.f32 %v1065, %v1133
    %v1135 = vand.u32 %v1134, 4294901760
    %v1136 = vsub.f32 %v1134, %v1135
    %v1137 = vand.u32 %v1136, 4294901760
    %1138 = vmatmul.mubr.f32.gmra.mrb[0].mxu0 %v1137
    %v1139 = vpop.f32.mrb[0].mxu0
    %v1140 = vadd.f32 0.0, %v1139
    %v1141 = vpop.f32.mrb[0].mxu0
    %1142 = vdwg.mxu0
    %1143 = vmatprep.subr.mxu0 0.0
    %v1144 = vand.u32 %v13, 4294901760
    %v1145 = vsub.f32 %v13, %v1144
    %v1146 = vand.u32 %v1145, 4294901760
    %v1147 = vsub.f32 %v1145, %v1146
    %v1148 = vand.u32 %v1147, 4294901760
    %1149 = vmatpush1.msra.mxu0 %v1148
    %1150 = vmatprep.subr.mxu0 0.0
    %1151 = vmatpush1.msra.mxu0 0.0
    %1152 = vmatprep.subr.mxu0 0.0
    %1153 = vmatpush1.msra.mxu0 0.0
    %1154 = vmatprep.subr.mxu0 0.0
    %1155 = vmatpush1.msra.mxu0 0.0
    %1156 = vmatprep.subr.mxu0 0.0
    %1157 = vmatpush1.msra.mxu0 0.0
    %1158 = vmatprep.subr.mxu0 0.0
    %1159 = vmatpush1.msra.mxu0 0.0
    %1160 = vmatprep.subr.mxu0 0.0
    %1161 = vmatpush1.msra.mxu0 0.0
    %1162 = vmatprep.subr.mxu0 0.0
    %1163 = vmatpush1.msra.mxu0 0.0
    %1164 = vmatprep.subr.mxu0 0.0
    %1165 = vmatpush1.msra.mxu0 0.0
    %1166 = vmatprep.subr.mxu0 0.0
    %1167 = vmatpush1.msra.mxu0 0.0
    %1168 = vmatprep.subr.mxu0 0.0
    %1169 = vmatpush1.msra.mxu0 0.0
    %1170 = vmatprep.subr.mxu0 0.0
    %1171 = vmatpush1.msra.mxu0 0.0
    %1172 = vmatprep.subr.mxu0 0.0
    %1173 = vmatpush1.msra.mxu0 0.0
    %1174 = vmatprep.subr.mxu0 0.0
    %1175 = vmatpush1.msra.mxu0 0.0
    %1176 = vmatprep.subr.mxu0 0.0
    %1177 = vmatpush1.msra.mxu0 0.0
    %1178 = vmatprep.subr.mxu0 0.0
    %1179 = vmatpush1.msra.mxu0 0.0
    %1180 = vmatprep.subr.mxu0 0.0
    %1181 = vmatpush1.msra.mxu0 0.0
    %1182 = vmatprep.subr.mxu0 0.0
    %1183 = vmatpush1.msra.mxu0 0.0
    %1184 = vmatprep.subr.mxu0 0.0
    %1185 = vmatpush1.msra.mxu0 0.0
    %1186 = vmatprep.subr.mxu0 0.0
    %1187 = vmatpush1.msra.mxu0 0.0
    %1188 = vmatprep.subr.mxu0 0.0
    %1189 = vmatpush1.msra.mxu0 0.0
    %1190 = vmatprep.subr.mxu0 0.0
    %1191 = vmatpush1.msra.mxu0 0.0
    %1192 = vmatprep.subr.mxu0 0.0
    %1193 = vmatpush1.msra.mxu0 0.0
    %1194 = vmatprep.subr.mxu0 0.0
    %1195 = vmatpush1.msra.mxu0 0.0
    %1196 = vmatprep.subr.mxu0 0.0
    %1197 = vmatpush1.msra.mxu0 0.0
    %1198 = vmatprep.subr.mxu0 0.0
    %1199 = vmatpush1.msra.mxu0 0.0
    %1200 = vmatprep.subr.mxu0 0.0
    %1201 = vmatpush1.msra.mxu0 0.0
    %1202 = vmatprep.subr.mxu0 0.0
    %1203 = vmatpush1.msra.mxu0 0.0
    %1204 = vmatprep.subr.mxu0 0.0
    %1205 = vmatpush1.msra.mxu0 0.0
    %1206 = vmatprep.subr.mxu0 0.0
    %1207 = vmatpush1.msra.mxu0 0.0
    %1208 = vmatprep.subr.mxu0 0.0
    %1209 = vmatpush1.msra.mxu0 0.0
    %1210 = vmatprep.subr.mxu0 0.0
    %1211 = vmatpush1.msra.mxu0 0.0
    %1212 = vmatprep.mubr.f32.mxu0 0.0
    %v1213 = vand.u32 %v1065, 4294901760
    %1214 = vmatmul.mubr.f32.gmra.mrb[0].mxu0 %v1213
    %v1215 = vpop.f32.mrb[0].mxu0
    %v1216 = vadd.f32 %v1140, %v1215
    %v1217 = vpop.f32.mrb[0].mxu0
    %1218 = vdwg.mxu0
    %1219 = vmatprep.subr.mxu0 0.0
    %v1220 = vand.u32 %v13, 4294901760
    %v1221 = vsub.f32 %v13, %v1220
    %1222 = vmatpush1.msra.mxu0 %v1221
    %1223 = vmatprep.subr.mxu0 0.0
    %1224 = vmatpush1.msra.mxu0 0.0
    %1225 = vmatprep.subr.mxu0 0.0
    %1226 = vmatpush1.msra.mxu0 0.0
    %1227 = vmatprep.subr.mxu0 0.0
    %1228 = vmatpush1.msra.mxu0 0.0
    %1229 = vmatprep.subr.mxu0 0.0
    %1230 = vmatpush1.msra.mxu0 0.0
    %1231 = vmatprep.subr.mxu0 0.0
    %1232 = vmatpush1.msra.mxu0 0.0
    %1233 = vmatprep.subr.mxu0 0.0
    %1234 = vmatpush1.msra.mxu0 0.0
    %1235 = vmatprep.subr.mxu0 0.0
    %1236 = vmatpush1.msra.mxu0 0.0
    %1237 = vmatprep.subr.mxu0 0.0
    %1238 = vmatpush1.msra.mxu0 0.0
    %1239 = vmatprep.subr.mxu0 0.0
    %1240 = vmatpush1.msra.mxu0 0.0
    %1241 = vmatprep.subr.mxu0 0.0
    %1242 = vmatpush1.msra.mxu0 0.0
    %1243 = vmatprep.subr.mxu0 0.0
    %1244 = vmatpush1.msra.mxu0 0.0
    %1245 = vmatprep.subr.mxu0 0.0
    %1246 = vmatpush1.msra.mxu0 0.0
    %1247 = vmatprep.subr.mxu0 0.0
    %1248 = vmatpush1.msra.mxu0 0.0
    %1249 = vmatprep.subr.mxu0 0.0
    %1250 = vmatpush1.msra.mxu0 0.0
    %1251 = vmatprep.subr.mxu0 0.0
    %1252 = vmatpush1.msra.mxu0 0.0
    %1253 = vmatprep.subr.mxu0 0.0
    %1254 = vmatpush1.msra.mxu0 0.0
    %1255 = vmatprep.subr.mxu0 0.0
    %1256 = vmatpush1.msra.mxu0 0.0
    %1257 = vmatprep.subr.mxu0 0.0
    %1258 = vmatpush1.msra.mxu0 0.0
    %1259 = vmatprep.subr.mxu0 0.0
    %1260 = vmatpush1.msra.mxu0 0.0
    %1261 = vmatprep.subr.mxu0 0.0
    %1262 = vmatpush1.msra.mxu0 0.0
    %1263 = vmatprep.subr.mxu0 0.0
    %1264 = vmatpush1.msra.mxu0 0.0
    %1265 = vmatprep.subr.mxu0 0.0
    %1266 = vmatpush1.msra.mxu0 0.0
    %1267 = vmatprep.subr.mxu0 0.0
    %1268 = vmatpush1.msra.mxu0 0.0
    %1269 = vmatprep.subr.mxu0 0.0
    %1270 = vmatpush1.msra.mxu0 0.0
    %1271 = vmatprep.subr.mxu0 0.0
    %1272 = vmatpush1.msra.mxu0 0.0
    %1273 = vmatprep.subr.mxu0 0.0
    %1274 = vmatpush1.msra.mxu0 0.0
    %1275 = vmatprep.subr.mxu0 0.0
    %1276 = vmatpush1.msra.mxu0 0.0
    %1277 = vmatprep.subr.mxu0 0.0
    %1278 = vmatpush1.msra.mxu0 0.0
    %1279 = vmatprep.subr.mxu0 0.0
    %1280 = vmatpush1.msra.mxu0 0.0
    %1281 = vmatprep.subr.mxu0 0.0
    %1282 = vmatpush1.msra.mxu0 0.0
    %1283 = vmatprep.subr.mxu0 0.0
    %1284 = vmatpush1.msra.mxu0 0.0
    %1285 = vmatprep.mubr.f32.mxu0 0.0
    %v1286 = vand.u32 %v1065, 4294901760
    %v1287 = vsub.f32 %v1065, %v1286
    %1288 = vmatmul.mubr.f32.gmra.mrb[0].mxu0 %v1287
    %v1289 = vpop.f32.mrb[0].mxu0
    %v1290 = vadd.f32 %v1216, %v1289
    %v1291 = vpop.f32.mrb[0].mxu0
    %1292 = vdwg.mxu0
    %1293 = vmatprep.subr.mxu0 0.0
    %v1294 = vand.u32 %v13, 4294901760
    %1295 = vmatpush1.msra.mxu0 %v1294
    %1296 = vmatprep.subr.mxu0 0.0
    %1297 = vmatpush1.msra.mxu0 0.0
    %1298 = vmatprep.subr.mxu0 0.0
    %1299 = vmatpush1.msra.mxu0 0.0
    %1300 = vmatprep.subr.mxu0 0.0
    %1301 = vmatpush1.msra.mxu0 0.0
    %1302 = vmatprep.subr.mxu0 0.0
    %1303 = vmatpush1.msra.mxu0 0.0
    %1304 = vmatprep.subr.mxu0 0.0
    %1305 = vmatpush1.msra.mxu0 0.0
    %1306 = vmatprep.subr.mxu0 0.0
    %1307 = vmatpush1.msra.mxu0 0.0
    %1308 = vmatprep.subr.mxu0 0.0
    %1309 = vmatpush1.msra.mxu0 0.0
    %1310 = vmatprep.subr.mxu0 0.0
    %1311 = vmatpush1.msra.mxu0 0.0
    %1312 = vmatprep.subr.mxu0 0.0
    %1313 = vmatpush1.msra.mxu0 0.0
    %1314 = vmatprep.subr.mxu0 0.0
    %1315 = vmatpush1.msra.mxu0 0.0
    %1316 = vmatprep.subr.mxu0 0.0
    %1317 = vmatpush1.msra.mxu0 0.0
    %1318 = vmatprep.subr.mxu0 0.0
    %1319 = vmatpush1.msra.mxu0 0.0
    %1320 = vmatprep.subr.mxu0 0.0
    %1321 = vmatpush1.msra.mxu0 0.0
    %1322 = vmatprep.subr.mxu0 0.0
    %1323 = vmatpush1.msra.mxu0 0.0
    %1324 = vmatprep.subr.mxu0 0.0
    %1325 = vmatpush1.msra.mxu0 0.0
    %1326 = vmatprep.subr.mxu0 0.0
    %1327 = vmatpush1.msra.mxu0 0.0
    %1328 = vmatprep.subr.mxu0 0.0
    %1329 = vmatpush1.msra.mxu0 0.0
    %1330 = vmatprep.subr.mxu0 0.0
    %1331 = vmatpush1.msra.mxu0 0.0
    %1332 = vmatprep.subr.mxu0 0.0
    %1333 = vmatpush1.msra.mxu0 0.0
    %1334 = vmatprep.subr.mxu0 0.0
    %1335 = vmatpush1.msra.mxu0 0.0
    %1336 = vmatprep.subr.mxu0 0.0
    %1337 = vmatpush1.msra.mxu0 0.0
    %1338 = vmatprep.subr.mxu0 0.0
    %1339 = vmatpush1.msra.mxu0 0.0
    %1340 = vmatprep.subr.mxu0 0.0
    %1341 = vmatpush1.msra.mxu0 0.0
    %1342 = vmatprep.subr.mxu0 0.0
    %1343 = vmatpush1.msra.mxu0 0.0
    %1344 = vmatprep.subr.mxu0 0.0
    %1345 = vmatpush1.msra.mxu0 0.0
    %1346 = vmatprep.subr.mxu0 0.0
    %1347 = vmatpush1.msra.mxu0 0.0
    %1348 = vmatprep.subr.mxu0 0.0
    %1349 = vmatpush1.msra.mxu0 0.0
    %1350 = vmatprep.subr.mxu0 0.0
    %1351 = vmatpush1.msra.mxu0 0.0
    %1352 = vmatprep.subr.mxu0 0.0
    %1353 = vmatpush1.msra.mxu0 0.0
    %1354 = vmatprep.subr.mxu0 0.0
    %1355 = vmatpush1.msra.mxu0 0.0
    %1356 = vmatprep.subr.mxu0 0.0
    %1357 = vmatpush1.msra.mxu0 0.0
    %1358 = vmatprep.mubr.f32.mxu0 0.0
    %v1359 = vand.u32 %v1065, 4294901760
    %v1360 = vsub.f32 %v1065, %v1359
    %v1361 = vand.u32 %v1360, 4294901760
    %1362 = vmatmul.mubr.f32.gmra.mrb[0].mxu0 %v1361
    %v1363 = vpop.f32.mrb[0].mxu0
    %v1364 = vadd.f32 %v1290, %v1363
    %v1365 = vpop.f32.mrb[0].mxu0
    %1366 = vdwg.mxu0
    %1367 = vmatprep.subr.mxu0 0.0
    %v1368 = vand.u32 %v13, 4294901760
    %v1369 = vsub.f32 %v13, %v1368
    %v1370 = vand.u32 %v1369, 4294901760
    %1371 = vmatpush1.msra.mxu0 %v1370
    %1372 = vmatprep.subr.mxu0 0.0
    %1373 = vmatpush1.msra.mxu0 0.0
    %1374 = vmatprep.subr.mxu0 0.0
    %1375 = vmatpush1.msra.mxu0 0.0
    %1376 = vmatprep.subr.mxu0 0.0
    %1377 = vmatpush1.msra.mxu0 0.0
    %1378 = vmatprep.subr.mxu0 0.0
    %1379 = vmatpush1.msra.mxu0 0.0
    %1380 = vmatprep.subr.mxu0 0.0
    %1381 = vmatpush1.msra.mxu0 0.0
    %1382 = vmatprep.subr.mxu0 0.0
    %1383 = vmatpush1.msra.mxu0 0.0
    %1384 = vmatprep.subr.mxu0 0.0
    %1385 = vmatpush1.msra.mxu0 0.0
    %1386 = vmatprep.subr.mxu0 0.0
    %1387 = vmatpush1.msra.mxu0 0.0
    %1388 = vmatprep.subr.mxu0 0.0
    %1389 = vmatpush1.msra.mxu0 0.0
    %1390 = vmatprep.subr.mxu0 0.0
    %1391 = vmatpush1.msra.mxu0 0.0
    %1392 = vmatprep.subr.mxu0 0.0
    %1393 = vmatpush1.msra.mxu0 0.0
    %1394 = vmatprep.subr.mxu0 0.0
    %1395 = vmatpush1.msra.mxu0 0.0
    %1396 = vmatprep.subr.mxu0 0.0
    %1397 = vmatpush1.msra.mxu0 0.0
    %1398 = vmatprep.subr.mxu0 0.0
    %1399 = vmatpush1.msra.mxu0 0.0
    %1400 = vmatprep.subr.mxu0 0.0
    %1401 = vmatpush1.msra.mxu0 0.0
    %1402 = vmatprep.subr.mxu0 0.0
    %1403 = vmatpush1.msra.mxu0 0.0
    %1404 = vmatprep.subr.mxu0 0.0
    %1405 = vmatpush1.msra.mxu0 0.0
    %1406 = vmatprep.subr.mxu0 0.0
    %1407 = vmatpush1.msra.mxu0 0.0
    %1408 = vmatprep.subr.mxu0 0.0
    %1409 = vmatpush1.msra.mxu0 0.0
    %1410 = vmatprep.subr.mxu0 0.0
    %1411 = vmatpush1.msra.mxu0 0.0
    %1412 = vmatprep.subr.mxu0 0.0
    %1413 = vmatpush1.msra.mxu0 0.0
    %1414 = vmatprep.subr.mxu0 0.0
    %1415 = vmatpush1.msra.mxu0 0.0
    %1416 = vmatprep.subr.mxu0 0.0
    %1417 = vmatpush1.msra.mxu0 0.0
    %1418 = vmatprep.subr.mxu0 0.0
    %1419 = vmatpush1.msra.mxu0 0.0
    %1420 = vmatprep.subr.mxu0 0.0
    %1421 = vmatpush1.msra.mxu0 0.0
    %1422 = vmatprep.subr.mxu0 0.0
    %1423 = vmatpush1.msra.mxu0 0.0
    %1424 = vmatprep.subr.mxu0 0.0
    %1425 = vmatpush1.msra.mxu0 0.0
    %1426 = vmatprep.subr.mxu0 0.0
    %1427 = vmatpush1.msra.mxu0 0.0
    %1428 = vmatprep.subr.mxu0 0.0
    %1429 = vmatpush1.msra.mxu0 0.0
    %1430 = vmatprep.subr.mxu0 0.0
    %1431 = vmatpush1.msra.mxu0 0.0
    %1432 = vmatprep.subr.mxu0 0.0
    %1433 = vmatpush1.msra.mxu0 0.0
    %1434 = vmatprep.mubr.f32.mxu0 0.0
    %v1435 = vand.u32 %v1065, 4294901760
    %1436 = vmatmul.mubr.f32.gmra.mrb[0].mxu0 %v1435
    %v1437 = vpop.f32.mrb[0].mxu0
    %v1438 = vadd.f32 %v1364, %v1437
    %v1439 = vpop.f32.mrb[0].mxu0
    %1440 = vdwg.mxu0
    %1441 = vmatprep.subr.mxu0 0.0
    %v1442 = vand.u32 %v13, 4294901760
    %1443 = vmatpush1.msra.mxu0 %v1442
    %1444 = vmatprep.subr.mxu0 0.0
    %1445 = vmatpush1.msra.mxu0 0.0
    %1446 = vmatprep.subr.mxu0 0.0
    %1447 = vmatpush1.msra.mxu0 0.0
    %1448 = vmatprep.subr.mxu0 0.0
    %1449 = vmatpush1.msra.mxu0 0.0
    %1450 = vmatprep.subr.mxu0 0.0
    %1451 = vmatpush1.msra.mxu0 0.0
    %1452 = vmatprep.subr.mxu0 0.0
    %1453 = vmatpush1.msra.mxu0 0.0
    %1454 = vmatprep.subr.mxu0 0.0
    %1455 = vmatpush1.msra.mxu0 0.0
    %1456 = vmatprep.subr.mxu0 0.0
    %1457 = vmatpush1.msra.mxu0 0.0
    %1458 = vmatprep.subr.mxu0 0.0
    %1459 = vmatpush1.msra.mxu0 0.0
    %1460 = vmatprep.subr.mxu0 0.0
    %1461 = vmatpush1.msra.mxu0 0.0
    %1462 = vmatprep.subr.mxu0 0.0
    %1463 = vmatpush1.msra.mxu0 0.0
    %1464 = vmatprep.subr.mxu0 0.0
    %1465 = vmatpush1.msra.mxu0 0.0
    %1466 = vmatprep.subr.mxu0 0.0
    %1467 = vmatpush1.msra.mxu0 0.0
    %1468 = vmatprep.subr.mxu0 0.0
    %1469 = vmatpush1.msra.mxu0 0.0
    %1470 = vmatprep.subr.mxu0 0.0
    %1471 = vmatpush1.msra.mxu0 0.0
    %1472 = vmatprep.subr.mxu0 0.0
    %1473 = vmatpush1.msra.mxu0 0.0
    %1474 = vmatprep.subr.mxu0 0.0
    %1475 = vmatpush1.msra.mxu0 0.0
    %1476 = vmatprep.subr.mxu0 0.0
    %1477 = vmatpush1.msra.mxu0 0.0
    %1478 = vmatprep.subr.mxu0 0.0
    %1479 = vmatpush1.msra.mxu0 0.0
    %1480 = vmatprep.subr.mxu0 0.0
    %1481 = vmatpush1.msra.mxu0 0.0
    %1482 = vmatprep.subr.mxu0 0.0
    %1483 = vmatpush1.msra.mxu0 0.0
    %1484 = vmatprep.subr.mxu0 0.0
    %1485 = vmatpush1.msra.mxu0 0.0
    %1486 = vmatprep.subr.mxu0 0.0
    %1487 = vmatpush1.msra.mxu0 0.0
    %1488 = vmatprep.subr.mxu0 0.0
    %1489 = vmatpush1.msra.mxu0 0.0
    %1490 = vmatprep.subr.mxu0 0.0
    %1491 = vmatpush1.msra.mxu0 0.0
    %1492 = vmatprep.subr.mxu0 0.0
    %1493 = vmatpush1.msra.mxu0 0.0
    %1494 = vmatprep.subr.mxu0 0.0
    %1495 = vmatpush1.msra.mxu0 0.0
    %1496 = vmatprep.subr.mxu0 0.0
    %1497 = vmatpush1.msra.mxu0 0.0
    %1498 = vmatprep.subr.mxu0 0.0
    %1499 = vmatpush1.msra.mxu0 0.0
    %1500 = vmatprep.subr.mxu0 0.0
    %1501 = vmatpush1.msra.mxu0 0.0
    %1502 = vmatprep.subr.mxu0 0.0
    %1503 = vmatpush1.msra.mxu0 0.0
    %1504 = vmatprep.subr.mxu0 0.0
    %1505 = vmatpush1.msra.mxu0 0.0
    %1506 = vmatprep.mubr.f32.mxu0 0.0
    %v1507 = vand.u32 %v1065, 4294901760
    %1508 = vmatmul.mubr.f32.gmra.mrb[0].mxu0 %v1507
    %v1509 = vpop.f32.mrb[0].mxu0
    %v1510 = vadd.f32 %v1438, %v1509
    %v1511 = vpop.f32.mrb[0].mxu0
    %1512 = vdwg.mxu0
    %v1514 = vrot.slane %v615, 1
    %v1517 = vrcp.pop %v615
    %v1518 = vmul.f32 %v1062, %v1517
    %v1519 = vrcp.pop %v1514
    %v1520 = vmul.f32 %v1510, %v1519
    %v1523 = vrot.slane %v1520, 7
    %v1524 = vsel %vm571, %v1523, %v1518
    %vm1526 = vcmask 254976
    %1527 = vst.msk [vmem:[#allocation2] sm:$0x3] %vm1526, %v1524
    // Predicated region
    $region10: #{tpu_custom_call.1} parent=1 // pred_check
      _
    $region11: #{tpu_custom_call.1} parent=1 // pred_check_branch
      %1529 = sbr.rel (0) target = $region13
    $region12: #{tpu_custom_call.1} parent=1 // pred_region
      %s1531 = ssub.s32 32, 32
      %1532 = vsyncadd [#allocation3], %s1531
      %s1534 = sshll.u32 [#allocation2], 4
      %s1535 = int_to_ptr.vmem [resolvable:$true] %s1534
      %1537 = dma.vmem_to_hbm [thread:$0]  %s1535, 32, %s2, [#allocation3]
    $region13: #{tpu_custom_call.1} parent=1 // pred_fallthru
      _
    // Predicated region
    $region14: #{tpu_custom_call.1} parent=1 // pred_check
      _
    $region15: #{tpu_custom_call.1} parent=1 // pred_check_branch
      %1539 = sbr.rel (0) target = $region17
    $region16: #{tpu_custom_call.1} parent=1 // pred_region
      %1540 = dma.done [#allocation3], 32
    $region17: #{tpu_custom_call.1} parent=1 // pred_fallthru
      _
    %1541 = vsyncpa [#allocation3], 1

</llo_original>
